<compile_context>
chip_gen: v7x
topology: tpu7x:2x2x1
jax: 0.10.0
libtpu: 0.0.40
codegen_flags: <defaults>
</compile_context>

<pallas_src>
from functools import partial

import jax
import jax.numpy as jnp
from jax.experimental import pallas as pl
from jax.experimental.pallas import tpu as pltpu


def _round_up(x, m):
    return ((x + m - 1) // m) * m


# ----------------------------- kernel bodies --------------------------------
def _linear_logsoftmax(x_ref, w_ref, b_ref):
    # x_ref: [TB, Din]      f32   (cast to bf16 in-kernel for the MXU)
    # w_ref: [Din, Dout_p]  bf16  (pre-transposed once in the wrapper, NN form)
    # b_ref: [1, Dout_p]    f32   (padded classes hold -1e9)
    x = x_ref[...].astype(jnp.bfloat16)
    z = jnp.dot(x, w_ref[...], preferred_element_type=jnp.float32)
    z = z + b_ref[...]                                    # f32 bias add
    m = jnp.max(z, axis=-1, keepdims=True)
    shifted = z - m
    e = jnp.exp(shifted)                                  # EUP
    s = jnp.sum(e, axis=-1, keepdims=True)                # XLU reduce
    return shifted, e, s


def _kernel_logits_probs(x_ref, w_ref, b_ref, logits_ref, probs_ref):
    shifted, e, s = _linear_logsoftmax(x_ref, w_ref, b_ref)
    logits_ref[...] = shifted - jnp.log(s)                # normalized logits
    probs_ref[...] = e * pl.reciprocal(s, approx=True)    # EUP reciprocal


def _kernel_logits_only(x_ref, w_ref, b_ref, logits_ref):
    shifted, _, s = _linear_logsoftmax(x_ref, w_ref, b_ref)
    logits_ref[...] = shifted - jnp.log(s)


# ------------------------------- wrapper ------------------------------------
def prepare_params(weight, bias):
    """One-time parameter preparation (hoisted off the per-call hot path).

    weight: [Dout, Din] f32 -> [Din, Dout_p] bf16 (pre-transposed, lane-padded)
    bias:   [Dout]      f32 -> [1, Dout_p]   f32  (padded classes -> -1e9)
    Returns (w_p, b_p, num_outputs).
    """
    Dout, Din = weight.shape
    Dout_p = _round_up(Dout, 128)
    NEG = jnp.float32(-1e9)
    w_p = jnp.zeros((Din, Dout_p), jnp.bfloat16).at[:, :Dout].set(
        weight.T.astype(jnp.bfloat16))
    b_p = jnp.full((1, Dout_p), NEG, jnp.float32).at[0, :Dout].set(
        bias.astype(jnp.float32))
    return w_p, b_p, Dout


@partial(jax.jit, static_argnames=("num_outputs", "tile_b", "return_probs"))
def categorical_net_apply(x, w_p, b_p, *, num_outputs, tile_b=512,
                          return_probs=True):
    """x: [B, Din] f32; w_p/b_p from prepare_params.

    Returns (logits, probs) if return_probs else logits; shapes [B, num_outputs]
    f32 — the parameters of the CustomFixedCategorical produced by the forward.
    """
    B, Din = x.shape
    Din_w, Dout_p = w_p.shape
    assert Din == Din_w

    # Tile selection: fewest tiles of size <= tile_b, last tile mostly full.
    n_tiles = max(1, pl.cdiv(B, tile_b))
    TB = _round_up(pl.cdiv(B, n_tiles), 8)       # f32 sublane granularity
    B_p = _round_up(B, TB)
    x_p = x if B_p == B else jnp.pad(x, ((0, B_p - B), (0, 0)))
    grid = (B_p // TB,)

    in_specs = [
        pl.BlockSpec((TB, Din), lambda i: (i, 0)),        # x: batch-tiled, f32
        pl.BlockSpec((Din, Dout_p), lambda i: (0, 0)),    # W: resident, bf16
        pl.BlockSpec((1, Dout_p), lambda i: (0, 0)),      # b: resident, f32
    ]
    out_block = pl.BlockSpec((TB, Dout_p), lambda i: (i, 0))
    compiler_params = pltpu.CompilerParams(
        dimension_semantics=("parallel",))                # shard tiles across TCs

    if return_probs:
        logits_p, probs_p = pl.pallas_call(
            _kernel_logits_probs,
            out_shape=(jax.ShapeDtypeStruct((B_p, Dout_p), jnp.float32),
                       jax.ShapeDtypeStruct((B_p, Dout_p), jnp.float32)),
            grid_spec=pltpu.PrefetchScalarGridSpec(
                num_scalar_prefetch=0, grid=grid,
                in_specs=in_specs, out_specs=[out_block, out_block]),
            compiler_params=compiler_params,
        )(x_p, w_p, b_p)
        return logits_p[:B, :num_outputs], probs_p[:B, :num_outputs]

    logits_p = pl.pallas_call(
        _kernel_logits_only,
        out_shape=jax.ShapeDtypeStruct((B_p, Dout_p), jnp.float32),
        grid_spec=pltpu.PrefetchScalarGridSpec(
            num_scalar_prefetch=0, grid=grid,
            in_specs=in_specs, out_specs=out_block),
        compiler_params=compiler_params,
    )(x_p, w_p, b_p)
    return logits_p[:B, :num_outputs]


# ---- plain-JAX distribution glue (mirrors CustomFixedCategorical methods) ----
def dist_mode(probs):
    # probs.argmax(dim=-1, keepdim=True)
    return jnp.argmax(probs, axis=-1, keepdims=True)


def dist_log_probs(logits, actions):
    # actions: [B, 1] int -> log_prob gathered from normalized logits -> [B, 1]
    a = actions.squeeze(-1)
    lp = jnp.take_along_axis(logits, a[:, None], axis=-1).squeeze(-1)
    return lp.reshape(actions.shape[0], -1).sum(-1, keepdims=True)


# TODO(synk): CustomFixedCategorical.sample is stochastic; use
# jax.random.categorical(key, logits)[..., None] outside the kernel.


# ---- deterministic parameter init (orthogonal, gain=0.01; bias=0) ----
def init_params(key, num_inputs, num_outputs, gain=0.01):
    a = jax.random.normal(key, (max(num_inputs, num_outputs),
                                min(num_inputs, num_outputs)), jnp.float32)
    q, r = jnp.linalg.qr(a)
    q = q * jnp.sign(jnp.diagonal(r))[None, :]
    if num_outputs <= num_inputs:
        w = q[:num_inputs, :num_outputs].T      # [Dout, Din], orthonormal rows
    else:
        w = q[:num_outputs, :num_inputs]
    weight = gain * w.astype(jnp.float32)
    bias = jnp.zeros((num_outputs,), jnp.float32)
    return weight, bias


def _reference(x, weight, bias):
    z = x @ weight.T + bias[None, :]
    return jax.nn.log_softmax(z, axis=-1)


if __name__ == "__main__":
    key = jax.random.PRNGKey(0)
    k_x, k_w, k_x2, k_w2, k_x3 = jax.random.split(key, 5)

    # Case 1: small policy head, single tile, no batch padding (B % 8 == 0).
    B, Din, Dout = 8, 32, 16
    x = jax.random.normal(k_x, (B, Din), jnp.float32)
    weight, bias = init_params(k_w, Din, Dout)
    w_p, b_p, n_out = prepare_params(weight, bias)     # one-time prep

    logits, probs = categorical_net_apply(x, w_p, b_p, num_outputs=n_out)
    jax.block_until_ready((logits, probs))

    ref = _reference(x, weight, bias)
    assert jnp.allclose(jnp.sum(probs, axis=-1), 1.0, atol=5e-3)
    assert jnp.allclose(logits, ref, atol=5e-3)
    assert jnp.allclose(probs, jnp.exp(ref), atol=5e-3)

    mode = dist_mode(probs)                            # [B, 1]
    lp = dist_log_probs(logits, mode)                  # [B, 1]
    jax.block_until_ready((mode, lp))
    assert mode.shape == (B, 1) and lp.shape == (B, 1)

    # Logits-only variant (caller that doesn't consume probs).
    logits_only = categorical_net_apply(x, w_p, b_p, num_outputs=n_out,
                                        return_probs=False)
    jax.block_until_ready(logits_only)
    assert jnp.allclose(logits_only, logits, atol=1e-6)

    # Case 2: multi-tile pipelined path (grid = 2; both v7x TCs busy).
    B2, Din2, Dout2 = 1024, 64, 6
    x2 = jax.random.normal(k_x2, (B2, Din2), jnp.float32)
    w2, b2 = init_params(k_w2, Din2, Dout2)
    w2_p, b2_p, n_out2 = prepare_params(w2, b2)
    logits2, probs2 = categorical_net_apply(x2, w2_p, b2_p, num_outputs=n_out2)
    jax.block_until_ready((logits2, probs2))
    ref2 = _reference(x2, w2, b2)
    assert jnp.allclose(jnp.sum(probs2, axis=-1), 1.0, atol=5e-3)
    assert jnp.allclose(logits2, ref2, atol=5e-3)

    # Case 3: ragged batch (exercises the batch-only pad path: B=20 -> 24).
    B3 = 20
    x3 = jax.random.normal(k_x3, (B3, Din), jnp.float32)
    logits3, probs3 = categorical_net_apply(x3, w_p, b_p, num_outputs=n_out)
    jax.block_until_ready((logits3, probs3))
    ref3 = _reference(x3, weight, bias)
    assert logits3.shape == (B3, Dout)
    assert jnp.allclose(logits3, ref3, atol=5e-3)
    assert jnp.allclose(jnp.sum(probs3, axis=-1), 1.0, atol=5e-3)

    print("KERNEL_OK")
</pallas_src>

<mosaic_0001>
module attributes {stable_mosaic.version = 11 : i64} {
  func.func @_kernel_logits_probs(%arg0: i32, %arg1: memref<8x32xf32, #tpu.memory_space<vmem>>, %arg2: memref<32x128xbf16, #tpu.memory_space<vmem>>, %arg3: memref<1x128xf32, #tpu.memory_space<vmem>>, %arg4: memref<8x128xf32, #tpu.memory_space<vmem>>, %arg5: memref<8x128xf32, #tpu.memory_space<vmem>>) attributes {dimension_semantics = [#tpu.dimension_semantics<parallel>], iteration_bounds = array<i64: 1>, scalar_prefetch = 0 : i64, scratch_operands = 0 : i64, tpu.core_type = #tpu.core_type<tc>, window_params = [{transform_indices = @transform_0, window_bounds = array<i64: 8, 32>}, {pipeline_mode = #tpu.pipeline_mode<synchronous>, transform_indices = @transform_1, window_bounds = array<i64: 32, 128>}, {pipeline_mode = #tpu.pipeline_mode<synchronous>, transform_indices = @transform_2, window_bounds = array<i64: 1, 128>}, {transform_indices = @transform_3, window_bounds = array<i64: 8, 128>}, {transform_indices = @transform_4, window_bounds = array<i64: 8, 128>}]} {
    %c0 = arith.constant 0 : index
    %c0_0 = arith.constant 0 : index
    %0 = vector.load %arg1[%c0, %c0_0] : memref<8x32xf32, #tpu.memory_space<vmem>>, vector<8x32xf32>
    %1 = arith.truncf %0 : vector<8x32xf32> to vector<8x32xbf16>
    %c0_1 = arith.constant 0 : index
    %c0_2 = arith.constant 0 : index
    %2 = vector.load %arg2[%c0_1, %c0_2] : memref<32x128xbf16, #tpu.memory_space<vmem>>, vector<32x128xbf16>
    %cst = arith.constant dense<0.000000e+00> : vector<8x128xf32>
    %3 = tpu.matmul %1, %2, %cst {dimension_numbers = #tpu.dot_dimension_numbers<[1], [0], [0], [1], [0, 0, 1, 1], [], []>} : vector<8x32xbf16>, vector<32x128xbf16>, vector<8x128xf32> -> vector<8x128xf32>
    %c0_3 = arith.constant 0 : index
    %c0_4 = arith.constant 0 : index
    %4 = vector.load %arg3[%c0_3, %c0_4] : memref<1x128xf32, #tpu.memory_space<vmem>>, vector<1x128xf32>
    %5 = vector.broadcast %4 : vector<1x128xf32> to vector<8x128xf32>
    %6 = arith.addf %3, %5 : vector<8x128xf32>
    %cst_5 = arith.constant dense<0xFF800000> : vector<8xf32>
    %7 = vector.multi_reduction <maximumf>, %6, %cst_5 [1] : vector<8x128xf32> to vector<8xf32>
    %8 = vector.shape_cast %7 : vector<8xf32> to vector<8x1xf32>
    %9 = vector.broadcast %8 : vector<8x1xf32> to vector<8x128xf32>
    %10 = arith.subf %6, %9 : vector<8x128xf32>
    %11 = math.exp %10 : vector<8x128xf32>
    %cst_6 = arith.constant dense<0.000000e+00> : vector<8xf32>
    %12 = vector.multi_reduction <add>, %11, %cst_6 [1] : vector<8x128xf32> to vector<8xf32>
    %13 = vector.shape_cast %12 : vector<8xf32> to vector<8x1xf32>
    %14 = math.log %13 : vector<8x1xf32>
    %15 = vector.broadcast %14 : vector<8x1xf32> to vector<8x128xf32>
    %16 = arith.subf %10, %15 : vector<8x128xf32>
    %c0_7 = arith.constant 0 : index
    %c0_8 = arith.constant 0 : index
    %17 = vector.load %arg4[%c0_7, %c0_8] : memref<8x128xf32, #tpu.memory_space<vmem>>, vector<8x128xf32>
    tpu.vector_store %arg4[%c0_7, %c0_8], %16 {strides = array<i32>} : memref<8x128xf32, #tpu.memory_space<vmem>>, vector<8x128xf32>,
    %18 = tpu.reciprocal %13 {approx = true} : vector<8x1xf32> -> vector<8x1xf32>
    %19 = vector.broadcast %18 : vector<8x1xf32> to vector<8x128xf32>
    %20 = arith.mulf %11, %19 : vector<8x128xf32>
    %c0_9 = arith.constant 0 : index
    %c0_10 = arith.constant 0 : index
    %21 = vector.load %arg5[%c0_9, %c0_10] : memref<8x128xf32, #tpu.memory_space<vmem>>, vector<8x128xf32>
    tpu.vector_store %arg5[%c0_9, %c0_10], %20 {strides = array<i32>} : memref<8x128xf32, #tpu.memory_space<vmem>>, vector<8x128xf32>,
    return
  }
  func.func @transform_0(%arg0: i32) -> (i32, i32) {
    %c0_i32 = arith.constant 0 : i32
    %c0_i32_0 = arith.constant 0 : i32
    return %arg0, %c0_i32 : i32, i32
  }
  func.func @transform_1(%arg0: i32) -> (i32, i32) {
    %c0_i32 = arith.constant 0 : i32
    %c0_i32_0 = arith.constant 0 : i32
    %c0_i32_1 = arith.constant 0 : i32
    return %c0_i32, %c0_i32_0 : i32, i32
  }
  func.func @transform_2(%arg0: i32) -> (i32, i32) {
    %c0_i32 = arith.constant 0 : i32
    %c0_i32_0 = arith.constant 0 : i32
    %c0_i32_1 = arith.constant 0 : i32
    return %c0_i32, %c0_i32_0 : i32, i32
  }
  func.func @transform_3(%arg0: i32) -> (i32, i32) {
    %c0_i32 = arith.constant 0 : i32
    %c0_i32_0 = arith.constant 0 : i32
    return %arg0, %c0_i32 : i32, i32
  }
  func.func @transform_4(%arg0: i32) -> (i32, i32) {
    %c0_i32 = arith.constant 0 : i32
    %c0_i32_0 = arith.constant 0 : i32
    return %arg0, %c0_i32 : i32, i32
  }
}

</mosaic_0001>

<llo_original>
// kernel: categorical_net_apply.1
$region0: #{categorical_net_apply.1}
  #allocation0 [shape = 'u32[]', space=smem, size = 0x4, offset = 0x4, fixed_abs, tag = 'smem constant byte address 0x4 - core index']
  #allocation1 [shape = 'u32[144,128]{1,0:T(1,128)}', space=vmem, size = 0x12000, scoped, tag = 'internal scratch']
  %s0 = inlined_call_operand.hbm [shape: f32[8,32], index: 0, kind: input, shape index: {}]
  %s1 = inlined_call_operand.hbm [shape: bf16[32,128], index: 1, kind: input, shape index: {}]
  %s2 = inlined_call_operand.vmem [shape: f32[1,128], index: 2, kind: input, shape index: {}]
  %s3 = inlined_call_operand.hbm [shape: f32[8,128], index: 3, kind: output, shape index: {0}]
  %s4 = inlined_call_operand.hbm [shape: f32[8,128], index: 4, kind: output, shape index: {1}]
  %5 = xla_tuple %s3, %s4
  %s6 = sld [smem:[#allocation0]]
  $region38: #{categorical_net_apply.1} parent=0
    _
  %s8 = ssub.s32 1, %s6
  %s9 = scalar_select 0, %s8, %s6
  $region1: #{categorical_net_apply.1} parent=0
    #allocation2 [shape = 'u8[4096]{0}', space=vmem, size = 0x1000, scoped, tag = 'input window, operand 0, single buffered']
    #allocation3 [shape = 's32[1]{0}', space=sflag, size = 0x4, scoped, tag = 'scoped memory for categorical_net_apply.1']
    #allocation4 [shape = 's32[1]{0}', space=sflag, size = 0x4, scoped, tag = 'scoped memory for categorical_net_apply.1']
    #allocation5 [shape = 'u8[8192]{0}', space=vmem, size = 0x2000, scoped, tag = 'input window, operand 1, single buffered']
    #allocation6 [shape = 's32[1]{0}', space=sflag, size = 0x4, scoped, tag = 'scoped memory for categorical_net_apply.1']
    #allocation7 [shape = 'u8[4096]{0}', space=vmem, size = 0x1000, scoped, tag = 'output window, operand 0, single buffered']
    #allocation8 [shape = 'u8[4096]{0}', space=vmem, size = 0x1000, scoped, tag = 'output window, operand 1, single buffered']
    #allocation9 [shape = 's32[1]{0}', space=sflag, size = 0x4, scoped, tag = 'scoped memory for categorical_net_apply.1']
    %10 = vsyncpa [#allocation3], 0
    %11 = vsyncpa [#allocation6], 0
    %12 = vsyncpa [#allocation4], 0
    %13 = vsyncpa [#allocation9], 0
    // Predicated region
    $region2: #{categorical_net_apply.1} parent=1 // pred_check
      _
    $region3: #{categorical_net_apply.1} parent=1 // pred_check_branch
      %15 = sbr.rel (0) target = $region5
    $region4: #{categorical_net_apply.1} parent=1 // pred_region
      %s17 = ssub.s32 128, 128
      %18 = vsyncadd [#allocation3], %s17
      %s20 = sshll.u32 [#allocation2], 4
      %s21 = int_to_ptr.vmem [resolvable:$true] %s20
      %23 = dma.hbm_to_vmem [thread:$0]  %s0, 128, %s21, [#allocation3]
    $region5: #{categorical_net_apply.1} parent=1 // pred_fallthru
      _
    // Predicated region
    $region6: #{categorical_net_apply.1} parent=1 // pred_check
      _
    $region7: #{categorical_net_apply.1} parent=1 // pred_check_branch
      %25 = sbr.rel (0) target = $region9
    $region8: #{categorical_net_apply.1} parent=1 // pred_region
      %s27 = ssub.s32 256, 256
      %28 = vsyncadd [#allocation6], %s27
      %s29 = sshll.u32 [#allocation5], 4
      %s30 = int_to_ptr.vmem [resolvable:$true] %s29
      %35 = dma.hbm_to_vmem [thread:$0]  %s1, 256, %s30, [#allocation6], 64, 64, 4
    $region9: #{categorical_net_apply.1} parent=1 // pred_fallthru
      _
    // Predicated region
    $region10: #{categorical_net_apply.1} parent=1 // pred_check
      _
    $region11: #{categorical_net_apply.1} parent=1 // pred_check_branch
      %37 = sbr.rel (0) target = $region13
    $region12: #{categorical_net_apply.1} parent=1 // pred_region
      _
    $region13: #{categorical_net_apply.1} parent=1 // pred_fallthru
      _
    // Predicated region
    $region14: #{categorical_net_apply.1} parent=1 // pred_check
      _
    $region15: #{categorical_net_apply.1} parent=1 // pred_check_branch
      %39 = sbr.rel (0) target = $region17
    $region16: #{categorical_net_apply.1} parent=1 // pred_region
      %40 = dma.done [#allocation3], 128
    $region17: #{categorical_net_apply.1} parent=1 // pred_fallthru
      _
    // Predicated region
    $region18: #{categorical_net_apply.1} parent=1 // pred_check
      _
    $region19: #{categorical_net_apply.1} parent=1 // pred_check_branch
      %42 = sbr.rel (0) target = $region21
    $region20: #{categorical_net_apply.1} parent=1 // pred_region
      %43 = dma.done [#allocation6], 256
    $region21: #{categorical_net_apply.1} parent=1 // pred_fallthru
      _
    %v45 = vld [vmem:[#allocation2] sm:$0xff]
    %v46 = vpack.c.bf16 %v45, %v45
    %v47 = vld [vmem:[#allocation5] sm:$0xf]
    %v48 = vld [vmem:[#allocation5 + $0x4] sm:$0xf]
    %v49 = vld [vmem:[#allocation5 + $0x8] sm:$0xf]
    %v50 = vld [vmem:[#allocation5 + $0xc] sm:$0xf]
    %v51 = vld [vmem:[%s2] sm:$0x1]
    %v53 = vlaneseq
    %v54 = vshrl.u32 %v53, 7
    %v55 = vsub.s32 0, %v54
    %v56 = vrot.slane %v51, %v55
    %v62 = vunpack.c.l.b16 %v47
    %v63 = vunpack.c.l.b16 %v48
    %v64 = vunpack.c.l.b16 %v49
    %v65 = vunpack.c.l.b16 %v50
    %v66 = vpack.c.b16 %v63, %v62
    %v67 = vpack.c.b16 %v65, %v64
    %vm70 = vcmask 261120
    %v72 = vsel %vm70, %v46, 0
    %74 = vmatprep.subr.bf16.mxu0 0
    %75 = vmatpush1.bf16.msra.mxu0 %v66
    %76 = vmatprep.subr.bf16.mxu0 0
    %77 = vmatpush1.bf16.msra.mxu0 %v67
    %78 = vmatprep.subr.bf16.mxu0 0
    %79 = vmatpush1.bf16.msra.mxu0 0
    %80 = vmatprep.subr.bf16.mxu0 0
    %81 = vmatpush1.bf16.msra.mxu0 0
    %82 = vmatprep.subr.bf16.mxu0 0
    %83 = vmatpush1.bf16.msra.mxu0 0
    %84 = vmatprep.subr.bf16.mxu0 0
    %85 = vmatpush1.bf16.msra.mxu0 0
    %86 = vmatprep.subr.bf16.mxu0 0
    %87 = vmatpush1.bf16.msra.mxu0 0
    %88 = vmatprep.subr.bf16.mxu0 0
    %89 = vmatpush1.bf16.msra.mxu0 0
    %90 = vmatprep.subr.bf16.mxu0 0
    %91 = vmatpush1.bf16.msra.mxu0 0
    %92 = vmatprep.subr.bf16.mxu0 0
    %93 = vmatpush1.bf16.msra.mxu0 0
    %94 = vmatprep.subr.bf16.mxu0 0
    %95 = vmatpush1.bf16.msra.mxu0 0
    %96 = vmatprep.subr.bf16.mxu0 0
    %97 = vmatpush1.bf16.msra.mxu0 0
    %98 = vmatprep.subr.bf16.mxu0 0
    %99 = vmatpush1.bf16.msra.mxu0 0
    %100 = vmatprep.subr.bf16.mxu0 0
    %101 = vmatpush1.bf16.msra.mxu0 0
    %102 = vmatprep.subr.bf16.mxu0 0
    %103 = vmatpush1.bf16.msra.mxu0 0
    %104 = vmatprep.subr.bf16.mxu0 0
    %105 = vmatpush1.bf16.msra.mxu0 0
    %106 = vmatprep.mubr.bf16.mxu0 0
    %107 = vmatmul.mubr.bf16.gmra.mrb[0].mxu0 %v72
    %v108 = vpop.f32.mrb[0].mxu0
    %v109 = vadd.f32 %v56, %v108
    %v110 = vpop.f32.mrb[0].mxu0
    %v111 = vpop.f32.mrb[0].mxu0
    %v112 = vpop.f32.mrb[0].mxu0
    %113 = vdwg.mxu0
    %114 = vmax.xlane.f32.xlu0 %v109
    %v115 = vpop.xlane.xlu0 %114
    %v116 = vsub.f32 %v109, %v115
    %v117 = vmul.f32 %v116, 1.442695
    %v118 = vpow.pop %v117
    %119 = vadd.xlane.f32.xlu0 %v118
    %v120 = vpop.xlane.xlu0 %119
    %v121 = vlog2.pop %v120
    %v122 = vmul.f32 %v121, 0.6931472
    %v123 = vsub.f32 %v116, %v122
    %124 = vst [vmem:[#allocation7] sm:$0xff] %v123
    %v125 = vrcp.pop %v120
    %v126 = vmul.f32 %v118, %v125
    %127 = vst [vmem:[#allocation8] sm:$0xff] %v126
    // Predicated region
    $region22: #{categorical_net_apply.1} parent=1 // pred_check
      _
    $region23: #{categorical_net_apply.1} parent=1 // pred_check_branch
      %129 = sbr.rel (0) target = $region25
    $region24: #{categorical_net_apply.1} parent=1 // pred_region
      %s131 = ssub.s32 128, 128
      %132 = vsyncadd [#allocation4], %s131
      %s134 = sshll.u32 [#allocation7], 4
      %s135 = int_to_ptr.vmem [resolvable:$true] %s134
      %137 = dma.vmem_to_hbm [thread:$0]  %s135, 128, %s3, [#allocation4]
    $region25: #{categorical_net_apply.1} parent=1 // pred_fallthru
      _
    // Predicated region
    $region26: #{categorical_net_apply.1} parent=1 // pred_check
      _
    $region27: #{categorical_net_apply.1} parent=1 // pred_check_branch
      %139 = sbr.rel (0) target = $region29
    $region28: #{categorical_net_apply.1} parent=1 // pred_region
      %s141 = ssub.s32 128, 128
      %142 = vsyncadd [#allocation9], %s141
      %s144 = sshll.u32 [#allocation8], 4
      %s145 = int_to_ptr.vmem [resolvable:$true] %s144
      %147 = dma.vmem_to_hbm [thread:$0]  %s145, 128, %s4, [#allocation9]
    $region29: #{categorical_net_apply.1} parent=1 // pred_fallthru
      _
    // Predicated region
    $region30: #{categorical_net_apply.1} parent=1 // pred_check
      _
    $region31: #{categorical_net_apply.1} parent=1 // pred_check_branch
      %149 = sbr.rel (0) target = $region33
    $region32: #{categorical_net_apply.1} parent=1 // pred_region
      %150 = dma.done [#allocation4], 128
    $region33: #{categorical_net_apply.1} parent=1 // pred_fallthru
      _
    // Predicated region
    $region34: #{categorical_net_apply.1} parent=1 // pred_check
      _
    $region35: #{categorical_net_apply.1} parent=1 // pred_check_branch
      %152 = sbr.rel (0) target = $region37
    $region36: #{categorical_net_apply.1} parent=1 // pred_region
      %153 = dma.done [#allocation9], 128
    $region37: #{categorical_net_apply.1} parent=1 // pred_fallthru
      _
    %154 = vsyncpa [#allocation3], 1
    %155 = vsyncpa [#allocation6], 1
    %156 = vsyncpa [#allocation4], 1
    %157 = vsyncpa [#allocation9], 1

</llo_original>
